<compile_context>
chip_gen: v6e
topology: v6e:2x2x1
jax: 0.10.0
libtpu: 0.0.40
codegen_flags: <defaults>
</compile_context>

<pallas_src>
import jax
import jax.numpy as jnp
from jax.experimental import pallas as pl
from jax.experimental.pallas import tpu as pltpu


def _round_up(v, m):
    return (v + m - 1) // m * m


def _pick_group_size(P, D, max_k=256):
    """Largest divisor G of P with G*D <= max_k; prefer >=2 grid steps when a
    still-MXU-filling (G*D >= 128) alternative exists (megacore / pipelining)."""
    best = 1
    for g in range(1, P + 1):
        if P % g == 0 and g * D <= max_k:
            best = g
    if P // best == 1:
        for g in range(best - 1, 0, -1):
            if P % g == 0 and P // g >= 2 and g * D >= 128:
                return g
    return best


def _primary_cap_group_kernel(x_ref, w_ref, o_ref):
    # x_ref : (1, B,  G*D )    activations for this capsule group (lane-dense K)
    # w_ref : (1, G*D, Npad)   block-diagonal weights for this group (lane-dense N)
    # o_ref : (1, B,  Npad)    lane-dense output slab
    #
    # One MXU matmul per grid step: M=B, K=G*D, N=Npad (multiple of 128).
    o_ref[0] = jnp.dot(
        x_ref[0], w_ref[0], preferred_element_type=jnp.float32
    ).astype(o_ref.dtype)


def primary_cap_layer(x, weights, *, group_size=None, weight_dtype=None):
    """
    x       : (B, P, D)     float32 activations
    weights : (P, S, D, D)  per-capsule weights, weights[p, s, d, k] = W_p[s*D + d, k]
    returns : (B, S, P, D)  float32, matching PrimaryCapLayer.forward
    """
    B, P, D = x.shape
    Pw, S, Dw, Dk = weights.shape
    assert (Pw, Dw, Dk) == (P, D, D), "weight shape must be (P, S, D, D)"
    N = S * D

    # --- capsule grouping (fills the MXU contraction depth) ------------------
    G = _pick_group_size(P, D) if group_size is None else group_size
    assert P % G == 0, "P must be divisible by the capsule group size"
    NG = P // G          # grid size (independent groups)
    GK = G * D           # contraction depth per MXU pass
    GN = G * N           # useful output lanes per group
    Npad = _round_up(GN, 128)   # lane-dense (unmasked vst) output width

    # --- wrapper-side layout prep (one-time XLA ops) --------------------------
    # x_g[g, b, i*D + k] = x[b, g*G + i, k]
    x_g = x.reshape(B, NG, G, D).transpose(1, 0, 2, 3).reshape(NG, B, GK)

    # w_t[g, i, k, s*D + d] = weights[g*G + i, s, d, k]
    w_t = weights.transpose(0, 3, 1, 2).reshape(NG, G, D, N)
    if weight_dtype is not None:
        w_t = w_t.astype(weight_dtype)
    # Block-diagonal pack: w_bd[g, i*D + k, j*N + n] = w_t[g, i, k, n] * (i == j)
    eye = jnp.eye(G, dtype=w_t.dtype)
    w_bd = jnp.einsum("gikn,ij->gikjn", w_t, eye).reshape(NG, GK, GN)
    if Npad > GN:
        w_bd = jnp.pad(w_bd, ((0, 0), (0, 0), (0, Npad - GN)))

    # --- cost / VMEM accounting ------------------------------------------------
    cost = pl.CostEstimate(
        flops=2 * B * P * S * D * D,
        transcendentals=0,
        bytes_accessed=int(
            x_g.size * x_g.dtype.itemsize
            + w_bd.size * w_bd.dtype.itemsize
            + NG * B * Npad * x.dtype.itemsize
        ),
    )
    # Padded (8,128)-tile block sizes, x4 for double-buffering headroom.
    x_blk = _round_up(B, 8) * _round_up(GK, 128) * x.dtype.itemsize
    w_blk = _round_up(GK, 8) * Npad * w_bd.dtype.itemsize
    o_blk = _round_up(B, 8) * Npad * x.dtype.itemsize
    vmem_limit = min(max(4 * (x_blk + w_blk + o_blk) + (4 << 20), 16 << 20), 64 << 20)

    # Deeper buffering on the streaming weight operand only when there is a
    # pipeline to hide (NG >= 2); otherwise keep the default (zero-risk path).
    w_spec_kwargs = {}
    if NG >= 2:
        w_spec_kwargs["pipeline_mode"] = pl.Buffered(3)

    out_g = pl.pallas_call(
        _primary_cap_group_kernel,
        out_shape=jax.ShapeDtypeStruct((NG, B, Npad), x.dtype),
        grid_spec=pltpu.PrefetchScalarGridSpec(
            num_scalar_prefetch=0,
            grid=(NG,),
            in_specs=[
                pl.BlockSpec((1, B, GK), lambda g: (g, 0, 0)),
                pl.BlockSpec((1, GK, Npad), lambda g: (g, 0, 0), **w_spec_kwargs),
            ],
            out_specs=pl.BlockSpec((1, B, Npad), lambda g: (g, 0, 0)),
        ),
        compiler_params=pltpu.CompilerParams(
            # Capsule groups are fully independent -> megacore sharding on v7x.
            dimension_semantics=("parallel",),
            vmem_limit_bytes=int(vmem_limit),
        ),
        cost_estimate=cost,
    )(x_g, w_bd)

    # (NG, B, Npad) -> drop zero pad -> (NG, B, G, S, D) -> (B, S, P, D)
    out = out_g[:, :, :GN].reshape(NG, B, G, S, D)
    out = out.transpose(1, 3, 0, 2, 4).reshape(B, S, P, D)
    return out


if __name__ == "__main__":
    # Small shapes consistent with the module's forward.
    # NOTE: at these toy sizes the call is launch-overhead dominated; the
    # kernel structure is sized for realistic (large P, large B) capsule counts.
    B = 2   # batch_size
    P = 4   # num_primary_cap
    S = 3   # num_sar_cap
    D = 16  # input_dim

    key = jax.random.PRNGKey(0)
    kx, kw = jax.random.split(key)

    x = jax.random.normal(kx, (B, P, D), dtype=jnp.float32)

    # Deterministic synthetic weights: one (S*D, D) linear weight per primary
    # capsule (bias=False in the PyTorch module), reshaped to (P, S, D, D).
    w_flat = 0.1 * jax.random.normal(kw, (P, S * D, D), dtype=jnp.float32)
    weights = w_flat.reshape(P, S, D, D)

    out = primary_cap_layer(x, weights)
    out = jax.block_until_ready(out)

    # Pure-JAX reference of the PyTorch forward semantics:
    #   ret[b, s, p, d] = sum_k x[b, p, k] * W_p[s*D + d, k]
    ref = jnp.einsum("bpk,psdk->bspd", x, weights)

    assert out.shape == (B, S, P, D), out.shape
    assert jnp.allclose(out, ref, atol=1e-5, rtol=1e-5), "mismatch vs reference"

    print("KERNEL_OK")
</pallas_src>

<mosaic_0001>
module attributes {stable_mosaic.version = 11 : i64} {
  func.func @_primary_cap_group_kernel(%arg0: i32, %arg1: memref<1x2x64xf32, #tpu.memory_space<vmem>>, %arg2: memref<1x64x256xf32, #tpu.memory_space<vmem>>, %arg3: memref<1x2x256xf32, #tpu.memory_space<vmem>>) attributes {dimension_semantics = [#tpu.dimension_semantics<parallel>], iteration_bounds = array<i64: 1>, scalar_prefetch = 0 : i64, scratch_operands = 0 : i64, tpu.core_type = #tpu.core_type<tc>, window_params = [{transform_indices = @transform_0, window_bounds = array<i64: 1, 2, 64>}, {transform_indices = @transform_1, window_bounds = array<i64: 1, 64, 256>}, {transform_indices = @transform_2, window_bounds = array<i64: 1, 2, 256>}]} {
    %c0 = arith.constant 0 : index
    %c0_0 = arith.constant 0 : index
    %c0_1 = arith.constant 0 : index
    %0 = vector.load %arg1[%c0, %c0_0, %c0_1] : memref<1x2x64xf32, #tpu.memory_space<vmem>>, vector<1x2x64xf32>
    %1 = vector.shape_cast %0 : vector<1x2x64xf32> to vector<2x64xf32>
    %c0_2 = arith.constant 0 : index
    %c0_3 = arith.constant 0 : index
    %c0_4 = arith.constant 0 : index
    %2 = vector.load %arg2[%c0_2, %c0_3, %c0_4] : memref<1x64x256xf32, #tpu.memory_space<vmem>>, vector<1x64x256xf32>
    %3 = vector.shape_cast %2 : vector<1x64x256xf32> to vector<64x256xf32>
    %cst = arith.constant dense<0.000000e+00> : vector<2x256xf32>
    %4 = tpu.matmul %1, %3, %cst {dimension_numbers = #tpu.dot_dimension_numbers<[1], [0], [0], [1], [0, 0, 1, 1], [], []>} : vector<2x64xf32>, vector<64x256xf32>, vector<2x256xf32> -> vector<2x256xf32>
    %c0_5 = arith.constant 0 : index
    %c0_6 = arith.constant 0 : index
    %c0_7 = arith.constant 0 : index
    %5 = vector.load %arg3[%c0_5, %c0_6, %c0_7] : memref<1x2x256xf32, #tpu.memory_space<vmem>>, vector<1x2x256xf32>
    %6 = vector.shape_cast %5 : vector<1x2x256xf32> to vector<2x256xf32>
    %7 = vector.shape_cast %4 : vector<2x256xf32> to vector<1x2x256xf32>
    tpu.vector_store %arg3[%c0_5, %c0_6, %c0_7], %7 {strides = array<i32>} : memref<1x2x256xf32, #tpu.memory_space<vmem>>, vector<1x2x256xf32>,
    return
  }
  func.func @transform_0(%arg0: i32) -> (i32, i32, i32) {
    %c0_i32 = arith.constant 0 : i32
    %c0_i32_0 = arith.constant 0 : i32
    %c0_i32_1 = arith.constant 0 : i32
    return %arg0, %c0_i32, %c0_i32_0 : i32, i32, i32
  }
  func.func @transform_1(%arg0: i32) -> (i32, i32, i32) {
    %c0_i32 = arith.constant 0 : i32
    %c0_i32_0 = arith.constant 0 : i32
    %c0_i32_1 = arith.constant 0 : i32
    return %arg0, %c0_i32, %c0_i32_0 : i32, i32, i32
  }
  func.func @transform_2(%arg0: i32) -> (i32, i32, i32) {
    %c0_i32 = arith.constant 0 : i32
    %c0_i32_0 = arith.constant 0 : i32
    %c0_i32_1 = arith.constant 0 : i32
    return %arg0, %c0_i32, %c0_i32_0 : i32, i32, i32
  }
}

</mosaic_0001>

<llo_original>
// kernel: tpu_custom_call.1
$region0: #{tpu_custom_call.1}
  #allocation0 [shape = 'u32[]', space=smem, size = 0x4, offset = 0x4, fixed_abs, tag = 'smem constant byte address 0x4 - core index']
  #allocation1 [shape = 'u32[144,128]{1,0:T(1,128)}', space=vmem, size = 0x12000, scoped, tag = 'internal scratch']
  %s0 = inlined_call_operand.hbm [shape: f32[1,2,64], index: 0, kind: input, shape index: {}]
  %s1 = inlined_call_operand.hbm [shape: f32[1,64,256], index: 1, kind: input, shape index: {}]
  %s2 = inlined_call_operand.hbm [shape: f32[1,2,256], index: 2, kind: output, shape index: {}]
  %s3 = sld [smem:[#allocation0]]
  $region26: #{tpu_custom_call.1} parent=0
    _
  %s5 = ssub.s32 1, %s3
  %s6 = scalar_select 0, %s5, %s3
  $region1: #{tpu_custom_call.1} parent=0
    #allocation2 [shape = 'u8[1024]{0}', space=vmem, size = 0x400, scoped, tag = 'input window, operand 0, single buffered']
    #allocation3 [shape = 's32[1]{0}', space=sflag, size = 0x4, scoped, tag = 'scoped memory for tpu_custom_call.1']
    #allocation4 [shape = 's32[1]{0}', space=sflag, size = 0x4, scoped, tag = 'scoped memory for tpu_custom_call.1']
    #allocation5 [shape = 'u8[65536]{0}', space=vmem, size = 0x10000, scoped, tag = 'input window, operand 1, single buffered']
    #allocation6 [shape = 's32[1]{0}', space=sflag, size = 0x4, scoped, tag = 'scoped memory for tpu_custom_call.1']
    #allocation7 [shape = 'u8[2048]{0}', space=vmem, size = 0x800, scoped, tag = 'output window, operand 0, single buffered']
    %7 = vsyncpa [#allocation3], 0
    %8 = vsyncpa [#allocation6], 0
    %9 = vsyncpa [#allocation4], 0
    // Predicated region
    $region2: #{tpu_custom_call.1} parent=1 // pred_check
      _
    $region3: #{tpu_custom_call.1} parent=1 // pred_check_branch
      %11 = sbr.rel (0) target = $region5
    $region4: #{tpu_custom_call.1} parent=1 // pred_region
      %s13 = ssub.s32 32, 32
      %14 = vsyncadd [#allocation3], %s13
      %s16 = sshll.u32 [#allocation2], 4
      %s17 = int_to_ptr.vmem [resolvable:$true] %s16
      %19 = dma.hbm_to_vmem [thread:$0]  %s0, 32, %s17, [#allocation3]
    $region5: #{tpu_custom_call.1} parent=1 // pred_fallthru
      _
    // Predicated region
    $region6: #{tpu_custom_call.1} parent=1 // pred_check
      _
    $region7: #{tpu_custom_call.1} parent=1 // pred_check_branch
      %21 = sbr.rel (0) target = $region9
    $region8: #{tpu_custom_call.1} parent=1 // pred_region
      %s23 = ssub.s32 2048, 2048
      %24 = vsyncadd [#allocation6], %s23
      %s25 = sshll.u32 [#allocation5], 4
      %s26 = int_to_ptr.vmem [resolvable:$true] %s25
      %31 = dma.hbm_to_vmem [thread:$0]  %s1, 2048, %s26, [#allocation6], 256, 256, 16
    $region9: #{tpu_custom_call.1} parent=1 // pred_fallthru
      _
    // Predicated region
    $region10: #{tpu_custom_call.1} parent=1 // pred_check
      _
    $region11: #{tpu_custom_call.1} parent=1 // pred_check_branch
      %33 = sbr.rel (0) target = $region13
    $region12: #{tpu_custom_call.1} parent=1 // pred_region
      %34 = dma.done [#allocation3], 32
    $region13: #{tpu_custom_call.1} parent=1 // pred_fallthru
      _
    // Predicated region
    $region14: #{tpu_custom_call.1} parent=1 // pred_check
      _
    $region15: #{tpu_custom_call.1} parent=1 // pred_check_branch
      %36 = sbr.rel (0) target = $region17
    $region16: #{tpu_custom_call.1} parent=1 // pred_region
      %37 = dma.done [#allocation6], 2048
    $region17: #{tpu_custom_call.1} parent=1 // pred_fallthru
      _
    %v38 = vld [vmem:[#allocation2] sm:$0x3]
    %v39 = vld [vmem:[#allocation5] sm:$0xff]
    %v40 = vld [vmem:[#allocation5 + $0x8] sm:$0xff]
    %v41 = vld [vmem:[#allocation5 + $0x10] sm:$0xff]
    %v42 = vld [vmem:[#allocation5 + $0x18] sm:$0xff]
    %v43 = vld [vmem:[#allocation5 + $0x20] sm:$0xff]
    %v44 = vld [vmem:[#allocation5 + $0x28] sm:$0xff]
    %v45 = vld [vmem:[#allocation5 + $0x30] sm:$0xff]
    %v46 = vld [vmem:[#allocation5 + $0x38] sm:$0xff]
    %v47 = vld [vmem:[#allocation5 + $0x40] sm:$0xff]
    %v48 = vld [vmem:[#allocation5 + $0x48] sm:$0xff]
    %v49 = vld [vmem:[#allocation5 + $0x50] sm:$0xff]
    %v50 = vld [vmem:[#allocation5 + $0x58] sm:$0xff]
    %v51 = vld [vmem:[#allocation5 + $0x60] sm:$0xff]
    %v52 = vld [vmem:[#allocation5 + $0x68] sm:$0xff]
    %v53 = vld [vmem:[#allocation5 + $0x70] sm:$0xff]
    %v54 = vld [vmem:[#allocation5 + $0x78] sm:$0xff]
    %vm55 = vcmask 523264
    %v57 = vsel %vm55, %v38, 0
    %59 = vmatprep.subr.mxu0 0.0
    %60 = vmatpush1.msra.mxu0 0.0
    %61 = vmatprep.subr.mxu0 0.0
    %62 = vmatpush1.msra.mxu0 0.0
    %63 = vmatprep.subr.mxu0 0.0
    %64 = vmatpush1.msra.mxu0 0.0
    %65 = vmatprep.subr.mxu0 0.0
    %66 = vmatpush1.msra.mxu0 0.0
    %67 = vmatprep.subr.mxu0 0.0
    %68 = vmatpush1.msra.mxu0 0.0
    %69 = vmatprep.subr.mxu0 0.0
    %70 = vmatpush1.msra.mxu0 0.0
    %71 = vmatprep.subr.mxu0 0.0
    %72 = vmatpush1.msra.mxu0 0.0
    %73 = vmatprep.subr.mxu0 0.0
    %74 = vmatpush1.msra.mxu0 0.0
    %75 = vmatprep.subr.mxu0 %v54
    %76 = vmatpush1.msra.mxu0 %v53
    %77 = vmatprep.subr.mxu0 %v52
    %78 = vmatpush1.msra.mxu0 %v51
    %79 = vmatprep.subr.mxu0 %v50
    %80 = vmatpush1.msra.mxu0 %v49
    %81 = vmatprep.subr.mxu0 %v48
    %82 = vmatpush1.msra.mxu0 %v47
    %83 = vmatprep.subr.mxu0 %v46
    %84 = vmatpush1.msra.mxu0 %v45
    %85 = vmatprep.subr.mxu0 %v44
    %86 = vmatpush1.msra.mxu0 %v43
    %87 = vmatprep.subr.mxu0 %v42
    %88 = vmatpush1.msra.mxu0 %v41
    %89 = vmatprep.subr.mxu0 %v40
    %90 = vmatpush1.msra.mxu0 %v39
    %91 = vmatprep.subr.mxu0 0.0
    %92 = vmatpush2.msra.mxu0 0.0
    %93 = vmatprep.subr.mxu0 0.0
    %94 = vmatpush2.msra.mxu0 0.0
    %95 = vmatprep.subr.mxu0 0.0
    %96 = vmatpush2.msra.mxu0 0.0
    %97 = vmatprep.subr.mxu0 0.0
    %98 = vmatpush2.msra.mxu0 0.0
    %99 = vmatprep.subr.mxu0 0.0
    %100 = vmatpush2.msra.mxu0 0.0
    %101 = vmatprep.subr.mxu0 0.0
    %102 = vmatpush2.msra.mxu0 0.0
    %103 = vmatprep.subr.mxu0 0.0
    %104 = vmatpush2.msra.mxu0 0.0
    %105 = vmatprep.subr.mxu0 0.0
    %106 = vmatpush2.msra.mxu0 0.0
    %107 = vmatprep.subr.mxu0 0.0
    %108 = vmatpush2.msra.mxu0 0.0
    %109 = vmatprep.subr.mxu0 0.0
    %110 = vmatpush2.msra.mxu0 0.0
    %111 = vmatprep.subr.mxu0 0.0
    %112 = vmatpush2.msra.mxu0 0.0
    %113 = vmatprep.subr.mxu0 0.0
    %114 = vmatpush2.msra.mxu0 0.0
    %115 = vmatprep.subr.mxu0 0.0
    %116 = vmatpush2.msra.mxu0 0.0
    %117 = vmatprep.subr.mxu0 0.0
    %118 = vmatpush2.msra.mxu0 0.0
    %119 = vmatprep.subr.mxu0 0.0
    %120 = vmatpush2.msra.mxu0 0.0
    %121 = vmatprep.subr.mxu0 0.0
    %122 = vmatpush2.msra.mxu0 0.0
    %123 = vmatprep.mubr.f32.mxu0 0.0
    %124 = vmatmul.mubr.f32.gmra.mxu0 %v57
    %v125 = vpop.f32.mrf.mxu0
    %v126 = vadd.f32 0.0, %v125
    %v127 = vpop.f32.mrf.mxu0
    %v128 = vadd.f32 0.0, %v127
    %129 = vdwg.mxu0
    %v132 = vcombine.low %v126, %v128
    %v134 = vunpack.c.l.s4 1983009808
    %v135 = vunpack.c.0.s8 %v134
    %v136 = vlaneseq
    %v137 = vshrl.u32 %v136, 7
    %v138 = vsub.s32 %v135, %v137
    %v139 = vrot.slane %v132, %v138
    %141 = vst [vmem:[#allocation7] sm:$0xf] %v139
    // Predicated region
    $region18: #{tpu_custom_call.1} parent=1 // pred_check
      _
    $region19: #{tpu_custom_call.1} parent=1 // pred_check_branch
      %143 = sbr.rel (0) target = $region21
    $region20: #{tpu_custom_call.1} parent=1 // pred_region
      %s145 = ssub.s32 64, 64
      %146 = vsyncadd [#allocation4], %s145
      %s148 = sshll.u32 [#allocation7], 4
      %s149 = int_to_ptr.vmem [resolvable:$true] %s148
      %151 = dma.vmem_to_hbm [thread:$0]  %s149, 64, %s2, [#allocation4]
    $region21: #{tpu_custom_call.1} parent=1 // pred_fallthru
      _
    // Predicated region
    $region22: #{tpu_custom_call.1} parent=1 // pred_check
      _
    $region23: #{tpu_custom_call.1} parent=1 // pred_check_branch
      %153 = sbr.rel (0) target = $region25
    $region24: #{tpu_custom_call.1} parent=1 // pred_region
      %154 = dma.done [#allocation4], 64
    $region25: #{tpu_custom_call.1} parent=1 // pred_fallthru
      _
    %155 = vsyncpa [#allocation3], 1
    %156 = vsyncpa [#allocation6], 1
    %157 = vsyncpa [#allocation4], 1

</llo_original>
